<compile_context>
chip_gen: v7x
topology: tpu7x:2x2x1
jax: 0.10.0
libtpu: 0.0.40
codegen_flags: <defaults>
</compile_context>

<pallas_src>
import functools

import jax
import jax.numpy as jnp
from jax import lax
from jax.experimental import pallas as pl
from jax.experimental.pallas import tpu as pltpu


_LANES = 128
# Conservative resident-table cap: fits the scoped-VMEM default on every
# generation (16 MiB v5e, 32 MiB v6e/v7x) with room for the output tile and
# double buffering.  Bigger tables fall back to quantize-then-gather.
_RESIDENT_TABLE_BYTES = 8 * 1024 * 1024


def _round_up(x, m):
    return ((x + m - 1) // m) * m


# ---------------------------------------------------------------------------
# Path (a): quantize the whole table (lane-dense elementwise sweep), gather
# with jnp.take in the wrapper.
# ---------------------------------------------------------------------------
def _lsq_quant_table_kernel(scal_ref, w_ref, o_ref, *, low, high):
    # scal_ref (SMEM): [alpha_eff, 1/alpha_eff], both exact f32.
    alpha = scal_ref[0]
    inv_alpha = scal_ref[1]
    w = w_ref[...]                                            # (tile_rows, 128)
    q = jnp.clip(jnp.round(w * inv_alpha), low, high) * alpha
    o_ref[...] = q.astype(o_ref.dtype)


def _quantize_table(weight, scal, low, high):
    f, e = weight.shape
    total = f * e
    rows = pl.cdiv(total, _LANES)
    tile_rows = min(1024, _round_up(rows, 8))                 # big, (8,128)-aligned tiles
    rows_pad = _round_up(rows, tile_rows)

    flat = weight.reshape(total)
    pad = rows_pad * _LANES - total
    if pad:
        flat = jnp.pad(flat, (0, pad))                        # zeros quantize to 0; sliced off
    w2d = flat.reshape(rows_pad, _LANES)                      # lane-dense view

    kernel = functools.partial(_lsq_quant_table_kernel, low=low, high=high)
    q2d = pl.pallas_call(
        kernel,
        out_shape=jax.ShapeDtypeStruct((rows_pad, _LANES), weight.dtype),
        grid_spec=pltpu.PrefetchScalarGridSpec(
            num_scalar_prefetch=1,                            # [alpha, 1/alpha] -> SMEM
            grid=(rows_pad // tile_rows,),
            in_specs=[pl.BlockSpec((tile_rows, _LANES), lambda i, s: (i, 0))],
            out_specs=pl.BlockSpec((tile_rows, _LANES), lambda i, s: (i, 0)),
        ),
        compiler_params=pltpu.CompilerParams(
            dimension_semantics=("parallel",)
        ),
    )(scal, w2d)

    return q2d.reshape(rows_pad * _LANES)[:total].reshape(f, e)


# ---------------------------------------------------------------------------
# Path (b): resident table in VMEM, batched in-kernel gather + quantize.
# ---------------------------------------------------------------------------
def _lsq_gather_kernel(ids_ref, scal_ref, w_ref, o_ref, gather_sc,
                       *, rows_per_tile, low, high):
    # ids_ref (SMEM): flattened indices; scal_ref (SMEM): [alpha, 1/alpha];
    # w_ref: the full (F, E) table resident in VMEM; o_ref: the (T, E) output
    # tile; gather_sc: (T, E) VMEM scratch so o_ref is written exactly once.
    t = pl.program_id(0)
    base = t * rows_per_tile

    def gather_row(r, carry):
        idx = ids_ref[base + r]
        gather_sc[pl.ds(r, 1), :] = w_ref[pl.ds(idx, 1), :]   # VMEM->VMEM row copy
        return carry

    lax.fori_loop(0, rows_per_tile, gather_row, 0,
                  unroll=True if rows_per_tile <= 32 else 8)

    # Vectorized LSQ quantize over the whole (T, E) tile (single pass, hoisted
    # reciprocal: one VPU multiply instead of a per-row vector divide).
    alpha = scal_ref[0]
    inv_alpha = scal_ref[1]
    w = gather_sc[...]
    q = jnp.clip(jnp.round(w * inv_alpha), low, high) * alpha
    o_ref[...] = q.astype(o_ref.dtype)


def _gather_quantize(ids, weight, scal, low, high):
    f, e = weight.shape
    n = ids.shape[0]
    tile = min(256, _round_up(n, 8))                          # T rows per grid step, multiple of 8
    n_pad = _round_up(n, tile)
    if n_pad != n:
        ids = jnp.pad(ids, (0, n_pad - n))                    # pad with row 0 (valid), dropped below
    # NOTE: ids live in SMEM via scalar prefetch; for production-sized N
    # (>~64K) prefetch per-tile slices instead.

    kernel = functools.partial(_lsq_gather_kernel,
                               rows_per_tile=tile, low=low, high=high)
    out = pl.pallas_call(
        kernel,
        out_shape=jax.ShapeDtypeStruct((n_pad, e), weight.dtype),
        grid_spec=pltpu.PrefetchScalarGridSpec(
            num_scalar_prefetch=2,                            # ids, [alpha, 1/alpha] -> SMEM
            grid=(n_pad // tile,),
            in_specs=[
                # Full table resident in VMEM (constant index_map -> fetched once).
                pl.BlockSpec((f, e), lambda t, ids_r, s_r: (0, 0)),
            ],
            out_specs=pl.BlockSpec((tile, e), lambda t, ids_r, s_r: (t, 0)),
            scratch_shapes=[pltpu.VMEM((tile, e), weight.dtype)],
        ),
        compiler_params=pltpu.CompilerParams(
            dimension_semantics=("parallel",)
        ),
    )(ids, scal, weight)

    return out[:n]


# ---------------------------------------------------------------------------
# Public wrapper (forward of Lsq_Embedding).
# ---------------------------------------------------------------------------
def lsq_embedding_pallas(x, weight, alpha_param, bit):
    """x: (B, S) int indices; weight: (F, E) f32; alpha_param: scalar f32."""
    b, s = x.shape
    f, e = weight.shape
    n = b * s

    low = float(-(2 ** (bit - 1)))
    high = float(2 ** (bit - 1) - 1)

    # Hoisted alpha handling: |alpha| + 1e-10 and its exact f32 reciprocal.
    alpha_eff = jnp.abs(alpha_param.astype(jnp.float32)) + jnp.float32(1e-10)
    inv_alpha = jnp.float32(1.0) / alpha_eff
    scal = jnp.stack([alpha_eff, inv_alpha]).astype(jnp.float32)

    ids = x.reshape(n).astype(jnp.int32)
    table_bytes = f * e * weight.dtype.itemsize

    if n >= f or table_bytes > _RESIDENT_TABLE_BYTES:
        # Quantize the table once (streamed, lane-dense), gather with XLA.
        qw = _quantize_table(weight, scal, low, high)
        out = jnp.take(qw, ids, axis=0)
    else:
        # Resident-table batched gather + quantize inside the kernel.
        out = _gather_quantize(ids, weight, scal, low, high)

    return out.reshape(b, s, e)


def lsq_embedding_ref(x, weight, alpha_param, bit):
    """Pure-JAX reference matching the PyTorch forward."""
    low = -(2 ** (bit - 1))
    high = 2 ** (bit - 1) - 1
    w = jnp.take(weight, x, axis=0)                           # F.embedding
    alpha = jnp.abs(alpha_param) + 1e-10
    wa = w / alpha
    return jnp.clip(jnp.round(wa), low, high) * alpha


if __name__ == "__main__":
    key = jax.random.PRNGKey(0)
    k_w1, k_x1, k_w2, k_x2 = jax.random.split(key, 4)

    fwd = jax.jit(lsq_embedding_pallas, static_argnames=("bit",))

    # --- Config 1: N < F  -> resident-table batched gather path -------------
    feature_num, emb_dim, bit = 64, 32, 8
    B, S = 2, 8
    weight1 = (0.003 * jax.random.normal(k_w1, (feature_num, emb_dim))).astype(jnp.float32)
    alpha1 = (jnp.mean(jnp.abs(weight1)) * 2.0 / (2.0 ** (bit - 1)) ** 0.5).astype(jnp.float32)
    x1 = jax.random.randint(k_x1, (B, S), 0, feature_num, dtype=jnp.int32)

    out1 = jax.block_until_ready(fwd(x1, weight1, alpha1, bit=bit))
    ref1 = lsq_embedding_ref(x1, weight1, alpha1, bit)
    assert out1.shape == (B, S, emb_dim)
    assert jnp.allclose(out1, ref1, atol=1e-6, rtol=1e-6), "gather-path mismatch vs reference"

    # --- Config 2: N >= F -> quantize-then-gather path -----------------------
    feature_num2, emb_dim2, bit2 = 16, 32, 4
    B2, S2 = 4, 8
    weight2 = (0.003 * jax.random.normal(k_w2, (feature_num2, emb_dim2))).astype(jnp.float32)
    alpha2 = (jnp.mean(jnp.abs(weight2)) * 2.0 / (2.0 ** (bit2 - 1)) ** 0.5).astype(jnp.float32)
    x2 = jax.random.randint(k_x2, (B2, S2), 0, feature_num2, dtype=jnp.int32)

    out2 = jax.block_until_ready(fwd(x2, weight2, alpha2, bit=bit2))
    ref2 = lsq_embedding_ref(x2, weight2, alpha2, bit2)
    assert out2.shape == (B2, S2, emb_dim2)
    assert jnp.allclose(out2, ref2, atol=1e-6, rtol=1e-6), "quantize-path mismatch vs reference"

    print("KERNEL_OK")
</pallas_src>

<mosaic_0001>
module attributes {stable_mosaic.version = 11 : i64} {
  func.func @_lsq_gather_kernel(%arg0: i32, %arg1: memref<16xi32, #tpu.memory_space<smem>>, %arg2: memref<2xf32, #tpu.memory_space<smem>>, %arg3: memref<64x32xf32, #tpu.memory_space<vmem>>, %arg4: memref<16x32xf32, #tpu.memory_space<vmem>>, %arg5: memref<16x32xf32, #tpu.memory_space<vmem>>) attributes {dimension_semantics = [#tpu.dimension_semantics<parallel>], iteration_bounds = array<i64: 1>, scalar_prefetch = 2 : i64, scratch_operands = 1 : i64, tpu.core_type = #tpu.core_type<tc>, window_params = [{pipeline_mode = #tpu.pipeline_mode<synchronous>, transform_indices = @transform_0, window_bounds = array<i64: 64, 32>}, {transform_indices = @transform_1, window_bounds = array<i64: 16, 32>}]} {
    %c16_i32 = arith.constant 16 : i32
    %0 = arith.muli %arg0, %c16_i32 : i32
    %c0_i32 = arith.constant 0 : i32
    %1 = arith.addi %0, %c0_i32 : i32
    %2 = arith.index_cast %1 : i32 to index
    %3 = memref.load %arg1[%2] : memref<16xi32, #tpu.memory_space<smem>>
    %4 = arith.index_cast %3 : i32 to index
    %c0 = arith.constant 0 : index
    %5 = vector.load %arg3[%4, %c0] : memref<64x32xf32, #tpu.memory_space<vmem>>, vector<1x32xf32>
    %6 = arith.index_cast %c0_i32 : i32 to index
    %c0_0 = arith.constant 0 : index
    %7 = vector.load %arg5[%6, %c0_0] : memref<16x32xf32, #tpu.memory_space<vmem>>, vector<1x32xf32>
    tpu.vector_store %arg5[%6, %c0_0], %5 {strides = array<i32>} : memref<16x32xf32, #tpu.memory_space<vmem>>, vector<1x32xf32>,
    %c1_i32 = arith.constant 1 : i32
    %8 = arith.addi %0, %c1_i32 : i32
    %9 = arith.index_cast %8 : i32 to index
    %10 = memref.load %arg1[%9] : memref<16xi32, #tpu.memory_space<smem>>
    %11 = arith.index_cast %10 : i32 to index
    %c0_1 = arith.constant 0 : index
    %12 = vector.load %arg3[%11, %c0_1] : memref<64x32xf32, #tpu.memory_space<vmem>>, vector<1x32xf32>
    %13 = arith.index_cast %c1_i32 : i32 to index
    %c0_2 = arith.constant 0 : index
    %14 = vector.load %arg5[%13, %c0_2] : memref<16x32xf32, #tpu.memory_space<vmem>>, vector<1x32xf32>
    tpu.vector_store %arg5[%13, %c0_2], %12 {strides = array<i32>} : memref<16x32xf32, #tpu.memory_space<vmem>>, vector<1x32xf32>,
    %c2_i32 = arith.constant 2 : i32
    %15 = arith.addi %0, %c2_i32 : i32
    %16 = arith.index_cast %15 : i32 to index
    %17 = memref.load %arg1[%16] : memref<16xi32, #tpu.memory_space<smem>>
    %18 = arith.index_cast %17 : i32 to index
    %c0_3 = arith.constant 0 : index
    %19 = vector.load %arg3[%18, %c0_3] : memref<64x32xf32, #tpu.memory_space<vmem>>, vector<1x32xf32>
    %20 = arith.index_cast %c2_i32 : i32 to index
    %c0_4 = arith.constant 0 : index
    %21 = vector.load %arg5[%20, %c0_4] : memref<16x32xf32, #tpu.memory_space<vmem>>, vector<1x32xf32>
    tpu.vector_store %arg5[%20, %c0_4], %19 {strides = array<i32>} : memref<16x32xf32, #tpu.memory_space<vmem>>, vector<1x32xf32>,
    %c3_i32 = arith.constant 3 : i32
    %22 = arith.addi %0, %c3_i32 : i32
    %23 = arith.index_cast %22 : i32 to index
    %24 = memref.load %arg1[%23] : memref<16xi32, #tpu.memory_space<smem>>
    %25 = arith.index_cast %24 : i32 to index
    %c0_5 = arith.constant 0 : index
    %26 = vector.load %arg3[%25, %c0_5] : memref<64x32xf32, #tpu.memory_space<vmem>>, vector<1x32xf32>
    %27 = arith.index_cast %c3_i32 : i32 to index
    %c0_6 = arith.constant 0 : index
    %28 = vector.load %arg5[%27, %c0_6] : memref<16x32xf32, #tpu.memory_space<vmem>>, vector<1x32xf32>
    tpu.vector_store %arg5[%27, %c0_6], %26 {strides = array<i32>} : memref<16x32xf32, #tpu.memory_space<vmem>>, vector<1x32xf32>,
    %c4_i32 = arith.constant 4 : i32
    %29 = arith.addi %0, %c4_i32 : i32
    %30 = arith.index_cast %29 : i32 to index
    %31 = memref.load %arg1[%30] : memref<16xi32, #tpu.memory_space<smem>>
    %32 = arith.index_cast %31 : i32 to index
    %c0_7 = arith.constant 0 : index
    %33 = vector.load %arg3[%32, %c0_7] : memref<64x32xf32, #tpu.memory_space<vmem>>, vector<1x32xf32>
    %34 = arith.index_cast %c4_i32 : i32 to index
    %c0_8 = arith.constant 0 : index
    %35 = vector.load %arg5[%34, %c0_8] : memref<16x32xf32, #tpu.memory_space<vmem>>, vector<1x32xf32>
    tpu.vector_store %arg5[%34, %c0_8], %33 {strides = array<i32>} : memref<16x32xf32, #tpu.memory_space<vmem>>, vector<1x32xf32>,
    %c5_i32 = arith.constant 5 : i32
    %36 = arith.addi %0, %c5_i32 : i32
    %37 = arith.index_cast %36 : i32 to index
    %38 = memref.load %arg1[%37] : memref<16xi32, #tpu.memory_space<smem>>
    %39 = arith.index_cast %38 : i32 to index
    %c0_9 = arith.constant 0 : index
    %40 = vector.load %arg3[%39, %c0_9] : memref<64x32xf32, #tpu.memory_space<vmem>>, vector<1x32xf32>
    %41 = arith.index_cast %c5_i32 : i32 to index
    %c0_10 = arith.constant 0 : index
    %42 = vector.load %arg5[%41, %c0_10] : memref<16x32xf32, #tpu.memory_space<vmem>>, vector<1x32xf32>
    tpu.vector_store %arg5[%41, %c0_10], %40 {strides = array<i32>} : memref<16x32xf32, #tpu.memory_space<vmem>>, vector<1x32xf32>,
    %c6_i32 = arith.constant 6 : i32
    %43 = arith.addi %0, %c6_i32 : i32
    %44 = arith.index_cast %43 : i32 to index
    %45 = memref.load %arg1[%44] : memref<16xi32, #tpu.memory_space<smem>>
    %46 = arith.index_cast %45 : i32 to index
    %c0_11 = arith.constant 0 : index
    %47 = vector.load %arg3[%46, %c0_11] : memref<64x32xf32, #tpu.memory_space<vmem>>, vector<1x32xf32>
    %48 = arith.index_cast %c6_i32 : i32 to index
    %c0_12 = arith.constant 0 : index
    %49 = vector.load %arg5[%48, %c0_12] : memref<16x32xf32, #tpu.memory_space<vmem>>, vector<1x32xf32>
    tpu.vector_store %arg5[%48, %c0_12], %47 {strides = array<i32>} : memref<16x32xf32, #tpu.memory_space<vmem>>, vector<1x32xf32>,
    %c7_i32 = arith.constant 7 : i32
    %50 = arith.addi %0, %c7_i32 : i32
    %51 = arith.index_cast %50 : i32 to index
    %52 = memref.load %arg1[%51] : memref<16xi32, #tpu.memory_space<smem>>
    %53 = arith.index_cast %52 : i32 to index
    %c0_13 = arith.constant 0 : index
    %54 = vector.load %arg3[%53, %c0_13] : memref<64x32xf32, #tpu.memory_space<vmem>>, vector<1x32xf32>
    %55 = arith.index_cast %c7_i32 : i32 to index
    %c0_14 = arith.constant 0 : index
    %56 = vector.load %arg5[%55, %c0_14] : memref<16x32xf32, #tpu.memory_space<vmem>>, vector<1x32xf32>
    tpu.vector_store %arg5[%55, %c0_14], %54 {strides = array<i32>} : memref<16x32xf32, #tpu.memory_space<vmem>>, vector<1x32xf32>,
    %c8_i32 = arith.constant 8 : i32
    %57 = arith.addi %0, %c8_i32 : i32
    %58 = arith.index_cast %57 : i32 to index
    %59 = memref.load %arg1[%58] : memref<16xi32, #tpu.memory_space<smem>>
    %60 = arith.index_cast %59 : i32 to index
    %c0_15 = arith.constant 0 : index
    %61 = vector.load %arg3[%60, %c0_15] : memref<64x32xf32, #tpu.memory_space<vmem>>, vector<1x32xf32>
    %62 = arith.index_cast %c8_i32 : i32 to index
    %c0_16 = arith.constant 0 : index
    %63 = vector.load %arg5[%62, %c0_16] : memref<16x32xf32, #tpu.memory_space<vmem>>, vector<1x32xf32>
    tpu.vector_store %arg5[%62, %c0_16], %61 {strides = array<i32>} : memref<16x32xf32, #tpu.memory_space<vmem>>, vector<1x32xf32>,
    %c9_i32 = arith.constant 9 : i32
    %64 = arith.addi %0, %c9_i32 : i32
    %65 = arith.index_cast %64 : i32 to index
    %66 = memref.load %arg1[%65] : memref<16xi32, #tpu.memory_space<smem>>
    %67 = arith.index_cast %66 : i32 to index
    %c0_17 = arith.constant 0 : index
    %68 = vector.load %arg3[%67, %c0_17] : memref<64x32xf32, #tpu.memory_space<vmem>>, vector<1x32xf32>
    %69 = arith.index_cast %c9_i32 : i32 to index
    %c0_18 = arith.constant 0 : index
    %70 = vector.load %arg5[%69, %c0_18] : memref<16x32xf32, #tpu.memory_space<vmem>>, vector<1x32xf32>
    tpu.vector_store %arg5[%69, %c0_18], %68 {strides = array<i32>} : memref<16x32xf32, #tpu.memory_space<vmem>>, vector<1x32xf32>,
    %c10_i32 = arith.constant 10 : i32
    %71 = arith.addi %0, %c10_i32 : i32
    %72 = arith.index_cast %71 : i32 to index
    %73 = memref.load %arg1[%72] : memref<16xi32, #tpu.memory_space<smem>>
    %74 = arith.index_cast %73 : i32 to index
    %c0_19 = arith.constant 0 : index
    %75 = vector.load %arg3[%74, %c0_19] : memref<64x32xf32, #tpu.memory_space<vmem>>, vector<1x32xf32>
    %76 = arith.index_cast %c10_i32 : i32 to index
    %c0_20 = arith.constant 0 : index
    %77 = vector.load %arg5[%76, %c0_20] : memref<16x32xf32, #tpu.memory_space<vmem>>, vector<1x32xf32>
    tpu.vector_store %arg5[%76, %c0_20], %75 {strides = array<i32>} : memref<16x32xf32, #tpu.memory_space<vmem>>, vector<1x32xf32>,
    %c11_i32 = arith.constant 11 : i32
    %78 = arith.addi %0, %c11_i32 : i32
    %79 = arith.index_cast %78 : i32 to index
    %80 = memref.load %arg1[%79] : memref<16xi32, #tpu.memory_space<smem>>
    %81 = arith.index_cast %80 : i32 to index
    %c0_21 = arith.constant 0 : index
    %82 = vector.load %arg3[%81, %c0_21] : memref<64x32xf32, #tpu.memory_space<vmem>>, vector<1x32xf32>
    %83 = arith.index_cast %c11_i32 : i32 to index
    %c0_22 = arith.constant 0 : index
    %84 = vector.load %arg5[%83, %c0_22] : memref<16x32xf32, #tpu.memory_space<vmem>>, vector<1x32xf32>
    tpu.vector_store %arg5[%83, %c0_22], %82 {strides = array<i32>} : memref<16x32xf32, #tpu.memory_space<vmem>>, vector<1x32xf32>,
    %c12_i32 = arith.constant 12 : i32
    %85 = arith.addi %0, %c12_i32 : i32
    %86 = arith.index_cast %85 : i32 to index
    %87 = memref.load %arg1[%86] : memref<16xi32, #tpu.memory_space<smem>>
    %88 = arith.index_cast %87 : i32 to index
    %c0_23 = arith.constant 0 : index
    %89 = vector.load %arg3[%88, %c0_23] : memref<64x32xf32, #tpu.memory_space<vmem>>, vector<1x32xf32>
    %90 = arith.index_cast %c12_i32 : i32 to index
    %c0_24 = arith.constant 0 : index
    %91 = vector.load %arg5[%90, %c0_24] : memref<16x32xf32, #tpu.memory_space<vmem>>, vector<1x32xf32>
    tpu.vector_store %arg5[%90, %c0_24], %89 {strides = array<i32>} : memref<16x32xf32, #tpu.memory_space<vmem>>, vector<1x32xf32>,
    %c13_i32 = arith.constant 13 : i32
    %92 = arith.addi %0, %c13_i32 : i32
    %93 = arith.index_cast %92 : i32 to index
    %94 = memref.load %arg1[%93] : memref<16xi32, #tpu.memory_space<smem>>
    %95 = arith.index_cast %94 : i32 to index
    %c0_25 = arith.constant 0 : index
    %96 = vector.load %arg3[%95, %c0_25] : memref<64x32xf32, #tpu.memory_space<vmem>>, vector<1x32xf32>
    %97 = arith.index_cast %c13_i32 : i32 to index
    %c0_26 = arith.constant 0 : index
    %98 = vector.load %arg5[%97, %c0_26] : memref<16x32xf32, #tpu.memory_space<vmem>>, vector<1x32xf32>
    tpu.vector_store %arg5[%97, %c0_26], %96 {strides = array<i32>} : memref<16x32xf32, #tpu.memory_space<vmem>>, vector<1x32xf32>,
    %c14_i32 = arith.constant 14 : i32
    %99 = arith.addi %0, %c14_i32 : i32
    %100 = arith.index_cast %99 : i32 to index
    %101 = memref.load %arg1[%100] : memref<16xi32, #tpu.memory_space<smem>>
    %102 = arith.index_cast %101 : i32 to index
    %c0_27 = arith.constant 0 : index
    %103 = vector.load %arg3[%102, %c0_27] : memref<64x32xf32, #tpu.memory_space<vmem>>, vector<1x32xf32>
    %104 = arith.index_cast %c14_i32 : i32 to index
    %c0_28 = arith.constant 0 : index
    %105 = vector.load %arg5[%104, %c0_28] : memref<16x32xf32, #tpu.memory_space<vmem>>, vector<1x32xf32>
    tpu.vector_store %arg5[%104, %c0_28], %103 {strides = array<i32>} : memref<16x32xf32, #tpu.memory_space<vmem>>, vector<1x32xf32>,
    %c15_i32 = arith.constant 15 : i32
    %106 = arith.addi %0, %c15_i32 : i32
    %107 = arith.index_cast %106 : i32 to index
    %108 = memref.load %arg1[%107] : memref<16xi32, #tpu.memory_space<smem>>
    %109 = arith.index_cast %108 : i32 to index
    %c0_29 = arith.constant 0 : index
    %110 = vector.load %arg3[%109, %c0_29] : memref<64x32xf32, #tpu.memory_space<vmem>>, vector<1x32xf32>
    %111 = arith.index_cast %c15_i32 : i32 to index
    %c0_30 = arith.constant 0 : index
    %112 = vector.load %arg5[%111, %c0_30] : memref<16x32xf32, #tpu.memory_space<vmem>>, vector<1x32xf32>
    tpu.vector_store %arg5[%111, %c0_30], %110 {strides = array<i32>} : memref<16x32xf32, #tpu.memory_space<vmem>>, vector<1x32xf32>,
    %c16_i32_31 = arith.constant 16 : i32
    %c0_32 = arith.constant 0 : index
    %113 = memref.load %arg2[%c0_32] : memref<2xf32, #tpu.memory_space<smem>>
    %c1 = arith.constant 1 : index
    %114 = memref.load %arg2[%c1] : memref<2xf32, #tpu.memory_space<smem>>
    %c0_33 = arith.constant 0 : index
    %c0_34 = arith.constant 0 : index
    %115 = vector.load %arg5[%c0_33, %c0_34] : memref<16x32xf32, #tpu.memory_space<vmem>>, vector<16x32xf32>
    %116 = vector.broadcast %114 : f32 to vector<16x32xf32>
    %117 = arith.mulf %115, %116 : vector<16x32xf32>
    %118 = math.roundeven %117 : vector<16x32xf32>
    %cst = arith.constant -1.280000e+02 : f32
    %cst_35 = arith.constant 1.270000e+02 : f32
    %119 = vector.broadcast %cst : f32 to vector<16x32xf32>
    %120 = arith.maximumf %119, %118 : vector<16x32xf32>
    %121 = vector.broadcast %cst_35 : f32 to vector<16x32xf32>
    %122 = arith.minimumf %121, %120 : vector<16x32xf32>
    %123 = vector.broadcast %113 : f32 to vector<16x32xf32>
    %124 = arith.mulf %122, %123 : vector<16x32xf32>
    %c0_36 = arith.constant 0 : index
    %c0_37 = arith.constant 0 : index
    %125 = vector.load %arg4[%c0_36, %c0_37] : memref<16x32xf32, #tpu.memory_space<vmem>>, vector<16x32xf32>
    tpu.vector_store %arg4[%c0_36, %c0_37], %124 {strides = array<i32>} : memref<16x32xf32, #tpu.memory_space<vmem>>, vector<16x32xf32>,
    return
  }
  func.func @transform_0(%arg0: i32, %arg1: memref<16xi32, #tpu.memory_space<smem>>, %arg2: memref<2xf32, #tpu.memory_space<smem>>) -> (i32, i32) {
    %c0_i32 = arith.constant 0 : i32
    %c0_i32_0 = arith.constant 0 : i32
    %c0_i32_1 = arith.constant 0 : i32
    return %c0_i32, %c0_i32_0 : i32, i32
  }
  func.func @transform_1(%arg0: i32, %arg1: memref<16xi32, #tpu.memory_space<smem>>, %arg2: memref<2xf32, #tpu.memory_space<smem>>) -> (i32, i32) {
    %c0_i32 = arith.constant 0 : i32
    %c0_i32_0 = arith.constant 0 : i32
    return %arg0, %c0_i32 : i32, i32
  }
}

</mosaic_0001>

<llo_original>
// kernel: lsq_embedding_pallas.1
$region0: #{lsq_embedding_pallas.1}
  #allocation0 [shape = 'u32[]', space=smem, size = 0x4, offset = 0x4, fixed_abs, tag = 'smem constant byte address 0x4 - core index']
  #allocation1 [shape = 'u32[144,128]{1,0:T(1,128)}', space=vmem, size = 0x12000, scoped, tag = 'internal scratch']
  #allocation2 [shape = 'f32[16,32]{1,0:T(8,128)}', space=vmem, size = 0x2000, scoped, tag = 'scratch operand']
  #allocation3 [shape = 's32[1]{0}', space=sflag, size = 0x4, scoped, tag = 'scoped memory for lsq_embedding_pallas.1']
  #allocation4 [shape = 'u8[512]{0}', space=smem, size = 0x200, scoped, tag = 'prefetched SMEM operand 0']
  #allocation5 [shape = 'u8[512]{0}', space=smem, size = 0x200, scoped, tag = 'prefetched SMEM operand 1']
  %s0 = inlined_call_operand.vmem [shape: s32[16], index: 0, kind: input, shape index: {}]
  %s1 = inlined_call_operand.vmem [shape: f32[2], index: 1, kind: input, shape index: {}]
  %s2 = inlined_call_operand.vmem [shape: f32[64,32], index: 2, kind: input, shape index: {}]
  %s3 = inlined_call_operand.hbm [shape: f32[16,32], index: 3, kind: output, shape index: {}]
  %s4 = sld [smem:[#allocation0]]
  $region14: #{lsq_embedding_pallas.1} parent=0
    _
  %s6 = ssub.s32 1, %s4
  %s7 = scalar_select 0, %s6, %s4
  %s8 = sshll.u32 %s0, 4
  %s9 = int_to_ptr.vmem [resolvable:$true] %s8
  %11 = dma.vmem_to_smem %s9, 16, [#allocation4], [#allocation3]
  %s12 = sshll.u32 %s1, 4
  %s13 = int_to_ptr.vmem [resolvable:$true] %s12
  %15 = dma.vmem_to_smem %s13, 16, [#allocation5], [#allocation3]
  %16 = dma.done [#allocation3], 32
  %17 = sfence
  $region1: #{lsq_embedding_pallas.1} parent=0
    #allocation6 [shape = 'u8[8192]{0}', space=vmem, size = 0x2000, scoped, tag = 'output window, operand 0, single buffered']
    #allocation7 [shape = 's32[1]{0}', space=sflag, size = 0x4, scoped, tag = 'scoped memory for lsq_embedding_pallas.1']
    %18 = vsyncpa [#allocation7], 0
    // Predicated region
    $region2: #{lsq_embedding_pallas.1} parent=1 // pred_check
      _
    $region3: #{lsq_embedding_pallas.1} parent=1 // pred_check_branch
      %20 = sbr.rel (0) target = $region5
    $region4: #{lsq_embedding_pallas.1} parent=1 // pred_region
      _
    $region5: #{lsq_embedding_pallas.1} parent=1 // pred_fallthru
      _
    %s21 = smul.u32 0, 16
    %s22 = sld [smem:[#allocation4 + %s21]]
    %s23 = scalar_lea.vmem %s2, %s22
    %v24 = vld [vmem:[%s23] sm:$0x1]
    %vm25 = vcmask 253952
    %26 = vst.msk [vmem:[#allocation2] sm:$0x1] %vm25, %v24
    %s27 = sadd.s32 %s21, 1
    %s28 = sld [smem:[#allocation4 + %s27]]
    %s29 = scalar_lea.vmem %s2, %s28
    %v30 = vld [vmem:[%s29] sm:$0x1]
    %31 = vst.msk [vmem:[#allocation2 + $0x1] sm:$0x1] %vm25, %v30
    %s32 = sadd.s32 %s21, 2
    %s33 = sld [smem:[#allocation4 + %s32]]
    %s34 = scalar_lea.vmem %s2, %s33
    %v35 = vld [vmem:[%s34] sm:$0x1]
    %36 = vst.msk [vmem:[#allocation2 + $0x2] sm:$0x1] %vm25, %v35
    %s37 = sadd.s32 %s21, 3
    %s38 = sld [smem:[#allocation4 + %s37]]
    %s39 = scalar_lea.vmem %s2, %s38
    %v40 = vld [vmem:[%s39] sm:$0x1]
    %41 = vst.msk [vmem:[#allocation2 + $0x3] sm:$0x1] %vm25, %v40
    %s42 = sadd.s32 %s21, 4
    %s43 = sld [smem:[#allocation4 + %s42]]
    %s44 = scalar_lea.vmem %s2, %s43
    %v45 = vld [vmem:[%s44] sm:$0x1]
    %46 = vst.msk [vmem:[#allocation2 + $0x4] sm:$0x1] %vm25, %v45
    %s47 = sadd.s32 %s21, 5
    %s48 = sld [smem:[#allocation4 + %s47]]
    %s49 = scalar_lea.vmem %s2, %s48
    %v50 = vld [vmem:[%s49] sm:$0x1]
    %51 = vst.msk [vmem:[#allocation2 + $0x5] sm:$0x1] %vm25, %v50
    %s52 = sadd.s32 %s21, 6
    %s53 = sld [smem:[#allocation4 + %s52]]
    %s54 = scalar_lea.vmem %s2, %s53
    %v55 = vld [vmem:[%s54] sm:$0x1]
    %56 = vst.msk [vmem:[#allocation2 + $0x6] sm:$0x1] %vm25, %v55
    %s57 = sadd.s32 %s21, 7
    %s58 = sld [smem:[#allocation4 + %s57]]
    %s59 = scalar_lea.vmem %s2, %s58
    %v60 = vld [vmem:[%s59] sm:$0x1]
    %61 = vst.msk [vmem:[#allocation2 + $0x7] sm:$0x1] %vm25, %v60
    %s62 = sadd.s32 %s21, 8
    %s63 = sld [smem:[#allocation4 + %s62]]
    %s64 = scalar_lea.vmem %s2, %s63
    %v65 = vld [vmem:[%s64] sm:$0x1]
    %66 = vst.msk [vmem:[#allocation2 + $0x8] sm:$0x1] %vm25, %v65
    %s67 = sadd.s32 %s21, 9
    %s68 = sld [smem:[#allocation4 + %s67]]
    %s69 = scalar_lea.vmem %s2, %s68
    %v70 = vld [vmem:[%s69] sm:$0x1]
    %71 = vst.msk [vmem:[#allocation2 + $0x9] sm:$0x1] %vm25, %v70
    %s72 = sadd.s32 %s21, 10
    %s73 = sld [smem:[#allocation4 + %s72]]
    %s74 = scalar_lea.vmem %s2, %s73
    %v75 = vld [vmem:[%s74] sm:$0x1]
    %76 = vst.msk [vmem:[#allocation2 + $0xa] sm:$0x1] %vm25, %v75
    %s77 = sadd.s32 %s21, 11
    %s78 = sld [smem:[#allocation4 + %s77]]
    %s79 = scalar_lea.vmem %s2, %s78
    %v80 = vld [vmem:[%s79] sm:$0x1]
    %81 = vst.msk [vmem:[#allocation2 + $0xb] sm:$0x1] %vm25, %v80
    %s82 = sadd.s32 %s21, 12
    %s83 = sld [smem:[#allocation4 + %s82]]
    %s84 = scalar_lea.vmem %s2, %s83
    %v85 = vld [vmem:[%s84] sm:$0x1]
    %86 = vst.msk [vmem:[#allocation2 + $0xc] sm:$0x1] %vm25, %v85
    %s87 = sadd.s32 %s21, 13
    %s88 = sld [smem:[#allocation4 + %s87]]
    %s89 = scalar_lea.vmem %s2, %s88
    %v90 = vld [vmem:[%s89] sm:$0x1]
    %91 = vst.msk [vmem:[#allocation2 + $0xd] sm:$0x1] %vm25, %v90
    %s92 = sadd.s32 %s21, 14
    %s93 = sld [smem:[#allocation4 + %s92]]
    %s94 = scalar_lea.vmem %s2, %s93
    %v95 = vld [vmem:[%s94] sm:$0x1]
    %96 = vst.msk [vmem:[#allocation2 + $0xe] sm:$0x1] %vm25, %v95
    %s97 = sadd.s32 %s21, 15
    %s98 = sld [smem:[#allocation4 + %s97]]
    %s99 = scalar_lea.vmem %s2, %s98
    %v100 = vld [vmem:[%s99] sm:$0x1]
    %101 = vst.msk [vmem:[#allocation2 + $0xf] sm:$0x1] %vm25, %v100
    %s102 = sld [smem:[#allocation5]]
    %s103 = sld [smem:[#allocation5 + $0x1]]
    %v104 = vld [vmem:[#allocation2] sm:$0xff]
    %v105 = vld [vmem:[#allocation2 + $0x8] sm:$0xff]
    %v106 = vstv %s103
    %v107 = vmul.f32 %v104, %v106
    %v108 = vmul.f32 %v105, %v106
    %v109 = vround.ne.pseudo %v107
    %v110 = vround.ne.pseudo %v108
    %v111 = vmax.f32 %v109, -128.0
    %v112 = vmax.f32 %v110, -128.0
    %v113 = vmin.f32 %v111, 127.0
    %v114 = vmin.f32 %v112, 127.0
    %v115 = vstv %s102
    %v116 = vmul.f32 %v113, %v115
    %v117 = vmul.f32 %v114, %v115
    %vm118 = vcmask 261120
    %119 = vst.msk [vmem:[#allocation6] sm:$0xff] %vm118, %v116
    %120 = vst.msk [vmem:[#allocation6 + $0x8] sm:$0xff] %vm118, %v117
    // Predicated region
    $region6: #{lsq_embedding_pallas.1} parent=1 // pred_check
      _
    $region7: #{lsq_embedding_pallas.1} parent=1 // pred_check_branch
      %122 = sbr.rel (0) target = $region9
    $region8: #{lsq_embedding_pallas.1} parent=1 // pred_region
      %s124 = ssub.s32 256, 256
      %125 = vsyncadd [#allocation7], %s124
      %s126 = sshll.u32 [#allocation6], 4
      %s127 = int_to_ptr.vmem [resolvable:$true] %s126
      %132 = dma.vmem_to_hbm [thread:$0]  %s127, 256, %s3, [#allocation7], 128, 128, 8
    $region9: #{lsq_embedding_pallas.1} parent=1 // pred_fallthru
      _
    // Predicated region
    $region10: #{lsq_embedding_pallas.1} parent=1 // pred_check
      _
    $region11: #{lsq_embedding_pallas.1} parent=1 // pred_check_branch
      %134 = sbr.rel (0) target = $region13
    $region12: #{lsq_embedding_pallas.1} parent=1 // pred_region
      %135 = dma.done [#allocation7], 256
    $region13: #{lsq_embedding_pallas.1} parent=1 // pred_fallthru
      _
    %136 = vsyncpa [#allocation7], 1

</llo_original>
